<compile_context>
chip_gen: v5e
topology: v5e:2x2
jax: 0.10.0
libtpu: 0.0.40
codegen_flags: <defaults>
</compile_context>

<pallas_src>
import jax
import jax.numpy as jnp
from jax.experimental import pallas as pl
from jax.experimental.pallas import tpu as pltpu

HIDDEN_SIZE = 128
INPUT_SIZE = 128
NUM_CLASSES = 2
NUM_LAYERS = 2  # hard-coded to 2 layers, matching the module (h0 has 2 layers)


def rnn_kernel(x_ref,      # (T*B, D)  bf16, time-major rows (t major, b minor)
               wih0_ref,   # (D, H)    bf16  = W_ih_l0^T
               whh0_ref,   # (H, H)    bf16  = W_hh_l0^T
               w1_ref,     # (2H, H)   bf16  = [W_ih_l1^T ; W_hh_l1^T]
               b0_ref,     # (1, H)    f32   = b_ih_l0 + b_hh_l0
               b1_ref,     # (1, H)    f32   = b_ih_l1 + b_hh_l1
               wfc_ref,    # (H, C)    f32   = W_fc^T
               bfc_ref,    # (1, C)    f32
               out_ref):   # (B, C)    f32
    B = out_ref.shape[0]
    TB, D = x_ref.shape
    T = TB // B
    H = whh0_ref.shape[0]

    # Non-recurrent layer-0 input projection, hoisted off the serial chain:
    # one large MXU matmul instead of T tiny (B, D) x (D, H) ones.
    p0 = (jnp.dot(x_ref[...], wih0_ref[...],
                  preferred_element_type=jnp.float32)
          + b0_ref[...])                                    # (T*B, H) f32

    whh0 = whh0_ref[...]
    w1 = w1_ref[...]
    b1 = b1_ref[...]

    h1 = jnp.zeros((B, H), jnp.float32)
    h2 = jnp.zeros((B, H), jnp.float32)

    # T is small and static -> fully unrolled loop with constant indices
    # (hidden states live in vregs; the scheduler sees the whole chain).
    for t in range(T):
        p0_t = p0[t * B:(t + 1) * B, :]                     # (B, H), static, 8-row aligned
        # layer 0: h1_t = tanh(P0[t] + h1_{t-1} @ Whh0^T)
        h1 = jnp.tanh(
            p0_t + jnp.dot(h1.astype(jnp.bfloat16), whh0,
                           preferred_element_type=jnp.float32))
        # layer 1 (fused K=2H): h2_t = tanh([h1_t, h2_{t-1}] @ [Wih1;Whh1]^T + b1)
        hcat = jnp.concatenate(
            [h1.astype(jnp.bfloat16), h2.astype(jnp.bfloat16)], axis=-1)  # (B, 2H)
        h2 = jnp.tanh(
            jnp.dot(hcat, w1, preferred_element_type=jnp.float32) + b1)

    # fc head on the last timestep's top-layer hidden state (one-time, f32).
    out_ref[...] = (
        jnp.dot(h2, wfc_ref[...], preferred_element_type=jnp.float32)
        + bfc_ref[...]).astype(out_ref.dtype)


def prepare_params(params):
    """One-time parameter prep: transpose, fuse biases, cast matmul operands to bf16."""
    wih0 = params["w_ih_l0"].T.astype(jnp.bfloat16)                      # (D, H)
    whh0 = params["w_hh_l0"].T.astype(jnp.bfloat16)                      # (H, H)
    b0 = (params["b_ih_l0"] + params["b_hh_l0"])[None, :].astype(jnp.float32)
    w1 = jnp.concatenate([params["w_ih_l1"].T, params["w_hh_l1"].T],
                         axis=0).astype(jnp.bfloat16)                    # (2H, H)
    b1 = (params["b_ih_l1"] + params["b_hh_l1"])[None, :].astype(jnp.float32)
    wfc = params["w_fc"].T.astype(jnp.float32)                           # (H, C)
    bfc = params["b_fc"][None, :].astype(jnp.float32)                    # (1, C)
    return (wih0, whh0, w1, b0, b1, wfc, bfc)


def rnn_forward(x_btd, prepared):
    """x_btd: (B, T, D) float32 (PyTorch batch_first layout). Returns (B, C) logits."""
    B, T, D = x_btd.shape
    C = NUM_CLASSES
    wih0, whh0, w1, b0, b1, wfc, bfc = prepared

    # Layout plumbing: time-major rows so each timestep's (B, D) block is
    # contiguous; cast the MXU operand to bf16.
    x_rows = jnp.transpose(x_btd, (1, 0, 2)).reshape(T * B, D).astype(jnp.bfloat16)

    vmem = lambda: pl.BlockSpec(memory_space=pltpu.MemorySpace.VMEM)
    out = pl.pallas_call(
        rnn_kernel,
        out_shape=jax.ShapeDtypeStruct((B, C), jnp.float32),
        in_specs=[vmem() for _ in range(8)],
        out_specs=vmem(),
    )(x_rows, wih0, whh0, w1, b0, b1, wfc, bfc)
    return out


def init_params(key):
    """Deterministic parameter init matching nn.RNN / nn.Linear shapes."""
    H, D, C = HIDDEN_SIZE, INPUT_SIZE, NUM_CLASSES
    ks = jax.random.split(key, 11)
    bound = 1.0 / jnp.sqrt(H)
    u = lambda k, shape: jax.random.uniform(k, shape, jnp.float32, -bound, bound)
    return {
        "w_ih_l0": u(ks[0], (H, D)),
        "w_hh_l0": u(ks[1], (H, H)),
        "b_ih_l0": u(ks[2], (H,)),
        "b_hh_l0": u(ks[3], (H,)),
        "w_ih_l1": u(ks[4], (H, H)),
        "w_hh_l1": u(ks[5], (H, H)),
        "b_ih_l1": u(ks[6], (H,)),
        "b_hh_l1": u(ks[7], (H,)),
        "w_fc": u(ks[8], (C, H)),
        "b_fc": u(ks[9], (C,)),
    }


def rnn_reference(x_btd, params):
    """Pure-JAX f32 reference replicating torch nn.RNN(tanh) + fc semantics."""
    B, T, D = x_btd.shape
    H = HIDDEN_SIZE
    h1 = jnp.zeros((B, H), jnp.float32)
    h2 = jnp.zeros((B, H), jnp.float32)
    for t in range(T):
        xt = x_btd[:, t, :]
        h1 = jnp.tanh(xt @ params["w_ih_l0"].T + params["b_ih_l0"]
                      + h1 @ params["w_hh_l0"].T + params["b_hh_l0"])
        h2 = jnp.tanh(h1 @ params["w_ih_l1"].T + params["b_ih_l1"]
                      + h2 @ params["w_hh_l1"].T + params["b_hh_l1"])
    return h2 @ params["w_fc"].T + params["b_fc"]


if __name__ == "__main__":
    key = jax.random.PRNGKey(0)
    k_x, k_p = jax.random.split(key)

    B, T = 8, 8
    x = jax.random.normal(k_x, (B, T, INPUT_SIZE), jnp.float32)
    params = init_params(k_p)
    prepared = prepare_params(params)

    out = jax.jit(rnn_forward)(x, prepared)
    out = jax.block_until_ready(out)

    ref = rnn_reference(x, params)
    assert out.shape == (B, NUM_CLASSES)
    # bf16 matmul operands -> loosened tolerance vs. the f32 reference.
    max_err = float(jnp.max(jnp.abs(out - ref)))
    assert jnp.allclose(out, ref, atol=5e-2, rtol=5e-2), (
        f"mismatch vs reference (max abs err {max_err})")

    print("KERNEL_OK")
</pallas_src>

<mosaic_0001>
module attributes {stable_mosaic.version = 11 : i64} {
  func.func @rnn_kernel(%arg0: memref<64x128xbf16, #tpu.memory_space<vmem>>, %arg1: memref<128x128xbf16, #tpu.memory_space<vmem>>, %arg2: memref<128x128xbf16, #tpu.memory_space<vmem>>, %arg3: memref<256x128xbf16, #tpu.memory_space<vmem>>, %arg4: memref<1x128xf32, #tpu.memory_space<vmem>>, %arg5: memref<1x128xf32, #tpu.memory_space<vmem>>, %arg6: memref<128x2xf32, #tpu.memory_space<vmem>>, %arg7: memref<1x2xf32, #tpu.memory_space<vmem>>, %arg8: memref<8x2xf32, #tpu.memory_space<vmem>>) attributes {dimension_semantics = [], scalar_prefetch = 0 : i64, scratch_operands = 0 : i64, tpu.core_type = #tpu.core_type<tc>} {
    %c0 = arith.constant 0 : index
    %c0_0 = arith.constant 0 : index
    %0 = vector.load %arg0[%c0, %c0_0] : memref<64x128xbf16, #tpu.memory_space<vmem>>, vector<64x128xbf16>
    %c0_1 = arith.constant 0 : index
    %c0_2 = arith.constant 0 : index
    %1 = vector.load %arg1[%c0_1, %c0_2] : memref<128x128xbf16, #tpu.memory_space<vmem>>, vector<128x128xbf16>
    %cst = arith.constant dense<0.000000e+00> : vector<64x128xf32>
    %2 = tpu.matmul %0, %1, %cst {dimension_numbers = #tpu.dot_dimension_numbers<[1], [0], [0], [1], [0, 0, 1, 1], [], []>} : vector<64x128xbf16>, vector<128x128xbf16>, vector<64x128xf32> -> vector<64x128xf32>
    %c0_3 = arith.constant 0 : index
    %c0_4 = arith.constant 0 : index
    %3 = vector.load %arg4[%c0_3, %c0_4] : memref<1x128xf32, #tpu.memory_space<vmem>>, vector<1x128xf32>
    %4 = vector.broadcast %3 : vector<1x128xf32> to vector<64x128xf32>
    %5 = arith.addf %2, %4 : vector<64x128xf32>
    %c0_5 = arith.constant 0 : index
    %c0_6 = arith.constant 0 : index
    %6 = vector.load %arg2[%c0_5, %c0_6] : memref<128x128xbf16, #tpu.memory_space<vmem>>, vector<128x128xbf16>
    %c0_7 = arith.constant 0 : index
    %c0_8 = arith.constant 0 : index
    %7 = vector.load %arg3[%c0_7, %c0_8] : memref<256x128xbf16, #tpu.memory_space<vmem>>, vector<256x128xbf16>
    %c0_9 = arith.constant 0 : index
    %c0_10 = arith.constant 0 : index
    %8 = vector.load %arg5[%c0_9, %c0_10] : memref<1x128xf32, #tpu.memory_space<vmem>>, vector<1x128xf32>
    %cst_11 = arith.constant 0.000000e+00 : f32
    %9 = vector.broadcast %cst_11 : f32 to vector<8x128xf32>
    %cst_12 = arith.constant 0.000000e+00 : f32
    %10 = vector.broadcast %cst_12 : f32 to vector<8x128xf32>
    %11 = vector.extract_strided_slice %5 {offsets = [0, 0], sizes = [8, 128], strides = [1, 1]} : vector<64x128xf32> to vector<8x128xf32>
    %12 = arith.truncf %9 : vector<8x128xf32> to vector<8x128xbf16>
    %cst_13 = arith.constant dense<0.000000e+00> : vector<8x128xf32>
    %13 = tpu.matmul %12, %6, %cst_13 {dimension_numbers = #tpu.dot_dimension_numbers<[1], [0], [0], [1], [0, 0, 1, 1], [], []>} : vector<8x128xbf16>, vector<128x128xbf16>, vector<8x128xf32> -> vector<8x128xf32>
    %14 = arith.addf %11, %13 : vector<8x128xf32>
    %15 = math.tanh %14 : vector<8x128xf32>
    %16 = arith.truncf %15 : vector<8x128xf32> to vector<8x128xbf16>
    %17 = arith.truncf %10 : vector<8x128xf32> to vector<8x128xbf16>
    %18 = tpu.concatenate %16, %17 in 1 : vector<8x128xbf16>, vector<8x128xbf16> -> vector<8x256xbf16>
    %cst_14 = arith.constant dense<0.000000e+00> : vector<8x128xf32>
    %19 = tpu.matmul %18, %7, %cst_14 {dimension_numbers = #tpu.dot_dimension_numbers<[1], [0], [0], [1], [0, 0, 1, 1], [], []>} : vector<8x256xbf16>, vector<256x128xbf16>, vector<8x128xf32> -> vector<8x128xf32>
    %20 = vector.broadcast %8 : vector<1x128xf32> to vector<8x128xf32>
    %21 = arith.addf %19, %20 : vector<8x128xf32>
    %22 = math.tanh %21 : vector<8x128xf32>
    %23 = vector.extract_strided_slice %5 {offsets = [8, 0], sizes = [8, 128], strides = [1, 1]} : vector<64x128xf32> to vector<8x128xf32>
    %24 = arith.truncf %15 : vector<8x128xf32> to vector<8x128xbf16>
    %cst_15 = arith.constant dense<0.000000e+00> : vector<8x128xf32>
    %25 = tpu.matmul %24, %6, %cst_15 {dimension_numbers = #tpu.dot_dimension_numbers<[1], [0], [0], [1], [0, 0, 1, 1], [], []>} : vector<8x128xbf16>, vector<128x128xbf16>, vector<8x128xf32> -> vector<8x128xf32>
    %26 = arith.addf %23, %25 : vector<8x128xf32>
    %27 = math.tanh %26 : vector<8x128xf32>
    %28 = arith.truncf %27 : vector<8x128xf32> to vector<8x128xbf16>
    %29 = arith.truncf %22 : vector<8x128xf32> to vector<8x128xbf16>
    %30 = tpu.concatenate %28, %29 in 1 : vector<8x128xbf16>, vector<8x128xbf16> -> vector<8x256xbf16>
    %cst_16 = arith.constant dense<0.000000e+00> : vector<8x128xf32>
    %31 = tpu.matmul %30, %7, %cst_16 {dimension_numbers = #tpu.dot_dimension_numbers<[1], [0], [0], [1], [0, 0, 1, 1], [], []>} : vector<8x256xbf16>, vector<256x128xbf16>, vector<8x128xf32> -> vector<8x128xf32>
    %32 = vector.broadcast %8 : vector<1x128xf32> to vector<8x128xf32>
    %33 = arith.addf %31, %32 : vector<8x128xf32>
    %34 = math.tanh %33 : vector<8x128xf32>
    %35 = vector.extract_strided_slice %5 {offsets = [16, 0], sizes = [8, 128], strides = [1, 1]} : vector<64x128xf32> to vector<8x128xf32>
    %36 = arith.truncf %27 : vector<8x128xf32> to vector<8x128xbf16>
    %cst_17 = arith.constant dense<0.000000e+00> : vector<8x128xf32>
    %37 = tpu.matmul %36, %6, %cst_17 {dimension_numbers = #tpu.dot_dimension_numbers<[1], [0], [0], [1], [0, 0, 1, 1], [], []>} : vector<8x128xbf16>, vector<128x128xbf16>, vector<8x128xf32> -> vector<8x128xf32>
    %38 = arith.addf %35, %37 : vector<8x128xf32>
    %39 = math.tanh %38 : vector<8x128xf32>
    %40 = arith.truncf %39 : vector<8x128xf32> to vector<8x128xbf16>
    %41 = arith.truncf %34 : vector<8x128xf32> to vector<8x128xbf16>
    %42 = tpu.concatenate %40, %41 in 1 : vector<8x128xbf16>, vector<8x128xbf16> -> vector<8x256xbf16>
    %cst_18 = arith.constant dense<0.000000e+00> : vector<8x128xf32>
    %43 = tpu.matmul %42, %7, %cst_18 {dimension_numbers = #tpu.dot_dimension_numbers<[1], [0], [0], [1], [0, 0, 1, 1], [], []>} : vector<8x256xbf16>, vector<256x128xbf16>, vector<8x128xf32> -> vector<8x128xf32>
    %44 = vector.broadcast %8 : vector<1x128xf32> to vector<8x128xf32>
    %45 = arith.addf %43, %44 : vector<8x128xf32>
    %46 = math.tanh %45 : vector<8x128xf32>
    %47 = vector.extract_strided_slice %5 {offsets = [24, 0], sizes = [8, 128], strides = [1, 1]} : vector<64x128xf32> to vector<8x128xf32>
    %48 = arith.truncf %39 : vector<8x128xf32> to vector<8x128xbf16>
    %cst_19 = arith.constant dense<0.000000e+00> : vector<8x128xf32>
    %49 = tpu.matmul %48, %6, %cst_19 {dimension_numbers = #tpu.dot_dimension_numbers<[1], [0], [0], [1], [0, 0, 1, 1], [], []>} : vector<8x128xbf16>, vector<128x128xbf16>, vector<8x128xf32> -> vector<8x128xf32>
    %50 = arith.addf %47, %49 : vector<8x128xf32>
    %51 = math.tanh %50 : vector<8x128xf32>
    %52 = arith.truncf %51 : vector<8x128xf32> to vector<8x128xbf16>
    %53 = arith.truncf %46 : vector<8x128xf32> to vector<8x128xbf16>
    %54 = tpu.concatenate %52, %53 in 1 : vector<8x128xbf16>, vector<8x128xbf16> -> vector<8x256xbf16>
    %cst_20 = arith.constant dense<0.000000e+00> : vector<8x128xf32>
    %55 = tpu.matmul %54, %7, %cst_20 {dimension_numbers = #tpu.dot_dimension_numbers<[1], [0], [0], [1], [0, 0, 1, 1], [], []>} : vector<8x256xbf16>, vector<256x128xbf16>, vector<8x128xf32> -> vector<8x128xf32>
    %56 = vector.broadcast %8 : vector<1x128xf32> to vector<8x128xf32>
    %57 = arith.addf %55, %56 : vector<8x128xf32>
    %58 = math.tanh %57 : vector<8x128xf32>
    %59 = vector.extract_strided_slice %5 {offsets = [32, 0], sizes = [8, 128], strides = [1, 1]} : vector<64x128xf32> to vector<8x128xf32>
    %60 = arith.truncf %51 : vector<8x128xf32> to vector<8x128xbf16>
    %cst_21 = arith.constant dense<0.000000e+00> : vector<8x128xf32>
    %61 = tpu.matmul %60, %6, %cst_21 {dimension_numbers = #tpu.dot_dimension_numbers<[1], [0], [0], [1], [0, 0, 1, 1], [], []>} : vector<8x128xbf16>, vector<128x128xbf16>, vector<8x128xf32> -> vector<8x128xf32>
    %62 = arith.addf %59, %61 : vector<8x128xf32>
    %63 = math.tanh %62 : vector<8x128xf32>
    %64 = arith.truncf %63 : vector<8x128xf32> to vector<8x128xbf16>
    %65 = arith.truncf %58 : vector<8x128xf32> to vector<8x128xbf16>
    %66 = tpu.concatenate %64, %65 in 1 : vector<8x128xbf16>, vector<8x128xbf16> -> vector<8x256xbf16>
    %cst_22 = arith.constant dense<0.000000e+00> : vector<8x128xf32>
    %67 = tpu.matmul %66, %7, %cst_22 {dimension_numbers = #tpu.dot_dimension_numbers<[1], [0], [0], [1], [0, 0, 1, 1], [], []>} : vector<8x256xbf16>, vector<256x128xbf16>, vector<8x128xf32> -> vector<8x128xf32>
    %68 = vector.broadcast %8 : vector<1x128xf32> to vector<8x128xf32>
    %69 = arith.addf %67, %68 : vector<8x128xf32>
    %70 = math.tanh %69 : vector<8x128xf32>
    %71 = vector.extract_strided_slice %5 {offsets = [40, 0], sizes = [8, 128], strides = [1, 1]} : vector<64x128xf32> to vector<8x128xf32>
    %72 = arith.truncf %63 : vector<8x128xf32> to vector<8x128xbf16>
    %cst_23 = arith.constant dense<0.000000e+00> : vector<8x128xf32>
    %73 = tpu.matmul %72, %6, %cst_23 {dimension_numbers = #tpu.dot_dimension_numbers<[1], [0], [0], [1], [0, 0, 1, 1], [], []>} : vector<8x128xbf16>, vector<128x128xbf16>, vector<8x128xf32> -> vector<8x128xf32>
    %74 = arith.addf %71, %73 : vector<8x128xf32>
    %75 = math.tanh %74 : vector<8x128xf32>
    %76 = arith.truncf %75 : vector<8x128xf32> to vector<8x128xbf16>
    %77 = arith.truncf %70 : vector<8x128xf32> to vector<8x128xbf16>
    %78 = tpu.concatenate %76, %77 in 1 : vector<8x128xbf16>, vector<8x128xbf16> -> vector<8x256xbf16>
    %cst_24 = arith.constant dense<0.000000e+00> : vector<8x128xf32>
    %79 = tpu.matmul %78, %7, %cst_24 {dimension_numbers = #tpu.dot_dimension_numbers<[1], [0], [0], [1], [0, 0, 1, 1], [], []>} : vector<8x256xbf16>, vector<256x128xbf16>, vector<8x128xf32> -> vector<8x128xf32>
    %80 = vector.broadcast %8 : vector<1x128xf32> to vector<8x128xf32>
    %81 = arith.addf %79, %80 : vector<8x128xf32>
    %82 = math.tanh %81 : vector<8x128xf32>
    %83 = vector.extract_strided_slice %5 {offsets = [48, 0], sizes = [8, 128], strides = [1, 1]} : vector<64x128xf32> to vector<8x128xf32>
    %84 = arith.truncf %75 : vector<8x128xf32> to vector<8x128xbf16>
    %cst_25 = arith.constant dense<0.000000e+00> : vector<8x128xf32>
    %85 = tpu.matmul %84, %6, %cst_25 {dimension_numbers = #tpu.dot_dimension_numbers<[1], [0], [0], [1], [0, 0, 1, 1], [], []>} : vector<8x128xbf16>, vector<128x128xbf16>, vector<8x128xf32> -> vector<8x128xf32>
    %86 = arith.addf %83, %85 : vector<8x128xf32>
    %87 = math.tanh %86 : vector<8x128xf32>
    %88 = arith.truncf %87 : vector<8x128xf32> to vector<8x128xbf16>
    %89 = arith.truncf %82 : vector<8x128xf32> to vector<8x128xbf16>
    %90 = tpu.concatenate %88, %89 in 1 : vector<8x128xbf16>, vector<8x128xbf16> -> vector<8x256xbf16>
    %cst_26 = arith.constant dense<0.000000e+00> : vector<8x128xf32>
    %91 = tpu.matmul %90, %7, %cst_26 {dimension_numbers = #tpu.dot_dimension_numbers<[1], [0], [0], [1], [0, 0, 1, 1], [], []>} : vector<8x256xbf16>, vector<256x128xbf16>, vector<8x128xf32> -> vector<8x128xf32>
    %92 = vector.broadcast %8 : vector<1x128xf32> to vector<8x128xf32>
    %93 = arith.addf %91, %92 : vector<8x128xf32>
    %94 = math.tanh %93 : vector<8x128xf32>
    %95 = vector.extract_strided_slice %5 {offsets = [56, 0], sizes = [8, 128], strides = [1, 1]} : vector<64x128xf32> to vector<8x128xf32>
    %96 = arith.truncf %87 : vector<8x128xf32> to vector<8x128xbf16>
    %cst_27 = arith.constant dense<0.000000e+00> : vector<8x128xf32>
    %97 = tpu.matmul %96, %6, %cst_27 {dimension_numbers = #tpu.dot_dimension_numbers<[1], [0], [0], [1], [0, 0, 1, 1], [], []>} : vector<8x128xbf16>, vector<128x128xbf16>, vector<8x128xf32> -> vector<8x128xf32>
    %98 = arith.addf %95, %97 : vector<8x128xf32>
    %99 = math.tanh %98 : vector<8x128xf32>
    %100 = arith.truncf %99 : vector<8x128xf32> to vector<8x128xbf16>
    %101 = arith.truncf %94 : vector<8x128xf32> to vector<8x128xbf16>
    %102 = tpu.concatenate %100, %101 in 1 : vector<8x128xbf16>, vector<8x128xbf16> -> vector<8x256xbf16>
    %cst_28 = arith.constant dense<0.000000e+00> : vector<8x128xf32>
    %103 = tpu.matmul %102, %7, %cst_28 {dimension_numbers = #tpu.dot_dimension_numbers<[1], [0], [0], [1], [0, 0, 1, 1], [], []>} : vector<8x256xbf16>, vector<256x128xbf16>, vector<8x128xf32> -> vector<8x128xf32>
    %104 = vector.broadcast %8 : vector<1x128xf32> to vector<8x128xf32>
    %105 = arith.addf %103, %104 : vector<8x128xf32>
    %106 = math.tanh %105 : vector<8x128xf32>
    %c0_29 = arith.constant 0 : index
    %c0_30 = arith.constant 0 : index
    %107 = vector.load %arg6[%c0_29, %c0_30] : memref<128x2xf32, #tpu.memory_space<vmem>>, vector<128x2xf32>
    %cst_31 = arith.constant dense<0.000000e+00> : vector<8x2xf32>
    %108 = tpu.matmul %106, %107, %cst_31 {dimension_numbers = #tpu.dot_dimension_numbers<[1], [0], [0], [1], [0, 0, 1, 1], [], []>} : vector<8x128xf32>, vector<128x2xf32>, vector<8x2xf32> -> vector<8x2xf32>
    %c0_32 = arith.constant 0 : index
    %c0_33 = arith.constant 0 : index
    %109 = vector.load %arg7[%c0_32, %c0_33] : memref<1x2xf32, #tpu.memory_space<vmem>>, vector<1x2xf32>
    %110 = vector.broadcast %109 : vector<1x2xf32> to vector<8x2xf32>
    %111 = arith.addf %108, %110 : vector<8x2xf32>
    %c0_34 = arith.constant 0 : index
    %c0_35 = arith.constant 0 : index
    %112 = vector.load %arg8[%c0_34, %c0_35] : memref<8x2xf32, #tpu.memory_space<vmem>>, vector<8x2xf32>
    tpu.vector_store %arg8[%c0_34, %c0_35], %111 {strides = array<i32>} : memref<8x2xf32, #tpu.memory_space<vmem>>, vector<8x2xf32>,
    return
  }
}

</mosaic_0001>

<llo_original>
// kernel: rnn_forward.1
$region0: #{rnn_forward.1}
  #allocation0 [shape = 'u32[]', space=smem, size = 0x4, offset = 0x4, fixed_abs, tag = 'smem constant byte address 0x4 - core index']
  #allocation1 [shape = 'u32[72,128]{1,0:T(1,128)}', space=vmem, size = 0x9000, scoped, tag = 'internal scratch']
  %s0 = inlined_call_operand.vmem [shape: bf16[64,128], index: 0, kind: input, shape index: {}]
  %s1 = inlined_call_operand.vmem [shape: bf16[128,128], index: 1, kind: input, shape index: {}]
  %s2 = inlined_call_operand.vmem [shape: bf16[128,128], index: 2, kind: input, shape index: {}]
  %s3 = inlined_call_operand.vmem [shape: bf16[256,128], index: 3, kind: input, shape index: {}]
  %s4 = inlined_call_operand.vmem [shape: f32[1,128], index: 4, kind: input, shape index: {}]
  %s5 = inlined_call_operand.vmem [shape: f32[1,128], index: 5, kind: input, shape index: {}]
  %s6 = inlined_call_operand.vmem [shape: f32[128,2], index: 6, kind: input, shape index: {}]
  %s7 = inlined_call_operand.vmem [shape: f32[1,2], index: 7, kind: input, shape index: {}]
  %s8 = inlined_call_operand.vmem [shape: f32[8,2], index: 8, kind: output, shape index: {}]
  %s9 = sld [smem:[#allocation0]]
  $region42: #{rnn_forward.1} parent=0
    _
  %s11 = ssub.s32 1, %s9
  %s12 = scalar_select 0, %s11, %s9
  // Predicated region
  $region2: #{rnn_forward.1} parent=0 // pred_check
    _
  $region3: #{rnn_forward.1} parent=0 // pred_check_branch
    %14 = sbr.rel (0) target = $region5
  $region4: #{rnn_forward.1} parent=0 // pred_region
    _
  $region5: #{rnn_forward.1} parent=0 // pred_fallthru
    _
  // Predicated region
  $region6: #{rnn_forward.1} parent=0 // pred_check
    _
  $region7: #{rnn_forward.1} parent=0 // pred_check_branch
    %16 = sbr.rel (0) target = $region9
  $region8: #{rnn_forward.1} parent=0 // pred_region
    _
  $region9: #{rnn_forward.1} parent=0 // pred_fallthru
    _
  // Predicated region
  $region10: #{rnn_forward.1} parent=0 // pred_check
    _
  $region11: #{rnn_forward.1} parent=0 // pred_check_branch
    %18 = sbr.rel (0) target = $region13
  $region12: #{rnn_forward.1} parent=0 // pred_region
    _
  $region13: #{rnn_forward.1} parent=0 // pred_fallthru
    _
  // Predicated region
  $region14: #{rnn_forward.1} parent=0 // pred_check
    _
  $region15: #{rnn_forward.1} parent=0 // pred_check_branch
    %20 = sbr.rel (0) target = $region17
  $region16: #{rnn_forward.1} parent=0 // pred_region
    _
  $region17: #{rnn_forward.1} parent=0 // pred_fallthru
    _
  // Predicated region
  $region18: #{rnn_forward.1} parent=0 // pred_check
    _
  $region19: #{rnn_forward.1} parent=0 // pred_check_branch
    %22 = sbr.rel (0) target = $region21
  $region20: #{rnn_forward.1} parent=0 // pred_region
    _
  $region21: #{rnn_forward.1} parent=0 // pred_fallthru
    _
  // Predicated region
  $region22: #{rnn_forward.1} parent=0 // pred_check
    _
  $region23: #{rnn_forward.1} parent=0 // pred_check_branch
    %24 = sbr.rel (0) target = $region25
  $region24: #{rnn_forward.1} parent=0 // pred_region
    _
  $region25: #{rnn_forward.1} parent=0 // pred_fallthru
    _
  // Predicated region
  $region26: #{rnn_forward.1} parent=0 // pred_check
    _
  $region27: #{rnn_forward.1} parent=0 // pred_check_branch
    %26 = sbr.rel (0) target = $region29
  $region28: #{rnn_forward.1} parent=0 // pred_region
    _
  $region29: #{rnn_forward.1} parent=0 // pred_fallthru
    _
  // Predicated region
  $region30: #{rnn_forward.1} parent=0 // pred_check
    _
  $region31: #{rnn_forward.1} parent=0 // pred_check_branch
    %28 = sbr.rel (0) target = $region33
  $region32: #{rnn_forward.1} parent=0 // pred_region
    _
  $region33: #{rnn_forward.1} parent=0 // pred_fallthru
    _
  %v30 = vld [vmem:[%s0] sm:$0xf]
  %v31 = vld [vmem:[%s0 + $0x4] sm:$0xf]
  %v32 = vld [vmem:[%s0 + $0x8] sm:$0xf]
  %v33 = vld [vmem:[%s0 + $0xc] sm:$0xf]
  %v34 = vld [vmem:[%s0 + $0x10] sm:$0xf]
  %v35 = vld [vmem:[%s0 + $0x14] sm:$0xf]
  %v36 = vld [vmem:[%s0 + $0x18] sm:$0xf]
  %v37 = vld [vmem:[%s0 + $0x1c] sm:$0xf]
  %v38 = vld [vmem:[%s1] sm:$0xf]
  %v39 = vld [vmem:[%s1 + $0x4] sm:$0xf]
  %v40 = vld [vmem:[%s1 + $0x8] sm:$0xf]
  %v41 = vld [vmem:[%s1 + $0xc] sm:$0xf]
  %v42 = vld [vmem:[%s1 + $0x10] sm:$0xf]
  %v43 = vld [vmem:[%s1 + $0x14] sm:$0xf]
  %v44 = vld [vmem:[%s1 + $0x18] sm:$0xf]
  %v45 = vld [vmem:[%s1 + $0x1c] sm:$0xf]
  %v46 = vld [vmem:[%s1 + $0x20] sm:$0xf]
  %v47 = vld [vmem:[%s1 + $0x24] sm:$0xf]
  %v48 = vld [vmem:[%s1 + $0x28] sm:$0xf]
  %v49 = vld [vmem:[%s1 + $0x2c] sm:$0xf]
  %v50 = vld [vmem:[%s1 + $0x30] sm:$0xf]
  %v51 = vld [vmem:[%s1 + $0x34] sm:$0xf]
  %v52 = vld [vmem:[%s1 + $0x38] sm:$0xf]
  %v53 = vld [vmem:[%s1 + $0x3c] sm:$0xf]
  %v54 = vld [vmem:[%s4] sm:$0x1]
  %v56 = vperm.slane %v54, 0
  %v66 = vunpack.c.l.b16 %v30
  %v67 = vunpack.c.l.b16 %v31
  %v68 = vunpack.c.l.b16 %v32
  %v69 = vunpack.c.l.b16 %v33
  %v70 = vunpack.c.l.b16 %v34
  %v71 = vunpack.c.l.b16 %v35
  %v72 = vunpack.c.l.b16 %v36
  %v73 = vunpack.c.l.b16 %v37
  %v74 = vpack.c.b16 %v67, %v66
  %v75 = vpack.c.b16 %v69, %v68
  %v76 = vpack.c.b16 %v71, %v70
  %v77 = vpack.c.b16 %v73, %v72
  %v98 = vunpack.c.l.b16 %v38
  %v99 = vunpack.c.l.b16 %v39
  %v100 = vunpack.c.l.b16 %v40
  %v101 = vunpack.c.l.b16 %v41
  %v102 = vunpack.c.l.b16 %v42
  %v103 = vunpack.c.l.b16 %v43
  %v104 = vunpack.c.l.b16 %v44
  %v105 = vunpack.c.l.b16 %v45
  %v106 = vunpack.c.l.b16 %v46
  %v107 = vunpack.c.l.b16 %v47
  %v108 = vunpack.c.l.b16 %v48
  %v109 = vunpack.c.l.b16 %v49
  %v110 = vunpack.c.l.b16 %v50
  %v111 = vunpack.c.l.b16 %v51
  %v112 = vunpack.c.l.b16 %v52
  %v113 = vunpack.c.l.b16 %v53
  %v114 = vpack.c.b16 %v99, %v98
  %v115 = vpack.c.b16 %v101, %v100
  %v116 = vpack.c.b16 %v103, %v102
  %v117 = vpack.c.b16 %v105, %v104
  %v118 = vpack.c.b16 %v107, %v106
  %v119 = vpack.c.b16 %v109, %v108
  %v120 = vpack.c.b16 %v111, %v110
  %v121 = vpack.c.b16 %v113, %v112
  %130 = vmatpush.bf16.msra.mxu0 %v121
  %131 = vmatpush.bf16.msra.mxu0 %v120
  %132 = vmatpush.bf16.msra.mxu0 %v119
  %133 = vmatpush.bf16.msra.mxu0 %v118
  %134 = vmatpush.bf16.msra.mxu0 %v117
  %135 = vmatpush.bf16.msra.mxu0 %v116
  %136 = vmatpush.bf16.msra.mxu0 %v115
  %137 = vmatpush.bf16.msra.mxu0 %v114
  %138 = vmatmul.bf16.gmra.mxu0 %v74
  %v139 = vpop.f32.mrf.mxu0
  %v140 = vadd.f32 %v56, %v139
  %v141 = vpop.f32.mrf.mxu0
  %v142 = vadd.f32 %v56, %v141
  %143 = vmatmul.bf16.gmra.mxu0 %v75
  %v144 = vpop.f32.mrf.mxu0
  %v145 = vadd.f32 %v56, %v144
  %v146 = vpop.f32.mrf.mxu0
  %v147 = vadd.f32 %v56, %v146
  %148 = vmatmul.bf16.gmra.mxu0 %v76
  %v149 = vpop.f32.mrf.mxu0
  %v150 = vadd.f32 %v56, %v149
  %v151 = vpop.f32.mrf.mxu0
  %v152 = vadd.f32 %v56, %v151
  %153 = vmatmul.bf16.gmra.mxu0 %v77
  %v154 = vpop.f32.mrf.mxu0
  %v155 = vadd.f32 %v56, %v154
  %v156 = vpop.f32.mrf.mxu0
  %v157 = vadd.f32 %v56, %v156
  %158 = vdwg.mxu0
  %v159 = vld [vmem:[%s2] sm:$0xf]
  %v160 = vld [vmem:[%s2 + $0x4] sm:$0xf]
  %v161 = vld [vmem:[%s2 + $0x8] sm:$0xf]
  %v162 = vld [vmem:[%s2 + $0xc] sm:$0xf]
  %v163 = vld [vmem:[%s2 + $0x10] sm:$0xf]
  %v164 = vld [vmem:[%s2 + $0x14] sm:$0xf]
  %v165 = vld [vmem:[%s2 + $0x18] sm:$0xf]
  %v166 = vld [vmem:[%s2 + $0x1c] sm:$0xf]
  %v167 = vld [vmem:[%s2 + $0x20] sm:$0xf]
  %v168 = vld [vmem:[%s2 + $0x24] sm:$0xf]
  %v169 = vld [vmem:[%s2 + $0x28] sm:$0xf]
  %v170 = vld [vmem:[%s2 + $0x2c] sm:$0xf]
  %v171 = vld [vmem:[%s2 + $0x30] sm:$0xf]
  %v172 = vld [vmem:[%s2 + $0x34] sm:$0xf]
  %v173 = vld [vmem:[%s2 + $0x38] sm:$0xf]
  %v174 = vld [vmem:[%s2 + $0x3c] sm:$0xf]
  %v175 = vld [vmem:[%s3] sm:$0xf]
  %v176 = vld [vmem:[%s3 + $0x4] sm:$0xf]
  %v177 = vld [vmem:[%s3 + $0x8] sm:$0xf]
  %v178 = vld [vmem:[%s3 + $0xc] sm:$0xf]
  %v179 = vld [vmem:[%s3 + $0x10] sm:$0xf]
  %v180 = vld [vmem:[%s3 + $0x14] sm:$0xf]
  %v181 = vld [vmem:[%s3 + $0x18] sm:$0xf]
  %v182 = vld [vmem:[%s3 + $0x1c] sm:$0xf]
  %v183 = vld [vmem:[%s3 + $0x20] sm:$0xf]
  %v184 = vld [vmem:[%s3 + $0x24] sm:$0xf]
  %v185 = vld [vmem:[%s3 + $0x28] sm:$0xf]
  %v186 = vld [vmem:[%s3 + $0x2c] sm:$0xf]
  %v187 = vld [vmem:[%s3 + $0x30] sm:$0xf]
  %v188 = vld [vmem:[%s3 + $0x34] sm:$0xf]
  %v189 = vld [vmem:[%s3 + $0x38] sm:$0xf]
  %v190 = vld [vmem:[%s3 + $0x3c] sm:$0xf]
  %v191 = vld [vmem:[%s3 + $0x40] sm:$0xf]
  %v192 = vld [vmem:[%s3 + $0x44] sm:$0xf]
  %v193 = vld [vmem:[%s3 + $0x48] sm:$0xf]
  %v194 = vld [vmem:[%s3 + $0x4c] sm:$0xf]
  %v195 = vld [vmem:[%s3 + $0x50] sm:$0xf]
  %v196 = vld [vmem:[%s3 + $0x54] sm:$0xf]
  %v197 = vld [vmem:[%s3 + $0x58] sm:$0xf]
  %v198 = vld [vmem:[%s3 + $0x5c] sm:$0xf]
  %v199 = vld [vmem:[%s3 + $0x60] sm:$0xf]
  %v200 = vld [vmem:[%s3 + $0x64] sm:$0xf]
  %v201 = vld [vmem:[%s3 + $0x68] sm:$0xf]
  %v202 = vld [vmem:[%s3 + $0x6c] sm:$0xf]
  %v203 = vld [vmem:[%s3 + $0x70] sm:$0xf]
  %v204 = vld [vmem:[%s3 + $0x74] sm:$0xf]
  %v205 = vld [vmem:[%s3 + $0x78] sm:$0xf]
  %v206 = vld [vmem:[%s3 + $0x7c] sm:$0xf]
  %v207 = vld [vmem:[%s5] sm:$0x1]
  %v224 = vunpack.c.l.b16 %v159
  %v225 = vunpack.c.l.b16 %v160
  %v226 = vunpack.c.l.b16 %v161
  %v227 = vunpack.c.l.b16 %v162
  %v228 = vunpack.c.l.b16 %v163
  %v229 = vunpack.c.l.b16 %v164
  %v230 = vunpack.c.l.b16 %v165
  %v231 = vunpack.c.l.b16 %v166
  %v232 = vunpack.c.l.b16 %v167
  %v233 = vunpack.c.l.b16 %v168
  %v234 = vunpack.c.l.b16 %v169
  %v235 = vunpack.c.l.b16 %v170
  %v236 = vunpack.c.l.b16 %v171
  %v237 = vunpack.c.l.b16 %v172
  %v238 = vunpack.c.l.b16 %v173
  %v239 = vunpack.c.l.b16 %v174
  %v240 = vpack.c.b16 %v225, %v224
  %v241 = vpack.c.b16 %v227, %v226
  %v242 = vpack.c.b16 %v229, %v228
  %v243 = vpack.c.b16 %v231, %v230
  %v244 = vpack.c.b16 %v233, %v232
  %v245 = vpack.c.b16 %v235, %v234
  %v246 = vpack.c.b16 %v237, %v236
  %v247 = vpack.c.b16 %v239, %v238
  %256 = vmatpush.bf16.msra.mxu0 %v247
  %257 = vmatpush.bf16.msra.mxu0 %v246
  %258 = vmatpush.bf16.msra.mxu0 %v245
  %259 = vmatpush.bf16.msra.mxu0 %v244
  %260 = vmatpush.bf16.msra.mxu0 %v243
  %261 = vmatpush.bf16.msra.mxu0 %v242
  %262 = vmatpush.bf16.msra.mxu0 %v241
  %263 = vmatpush.bf16.msra.mxu0 %v240
  %264 = vmatmul.bf16.gmra.mxu0 0
  %v265 = vpop.f32.mrf.mxu0
  %v266 = vadd.f32 0.0, %v265
  %v267 = vpop.f32.mrf.mxu0
  %268 = vdwg.mxu0
  %v269 = vadd.f32 %v140, %v266
  %v270 = vtanh.pop %v269
  %v271 = vpack.c.bf16 %v270, %v270
  %v273 = vperm.slane %v207, 0
  %v307 = vunpack.c.l.b16 %v175
  %v308 = vunpack.c.l.b16 %v176
  %v309 = vunpack.c.l.b16 %v177
  %v310 = vunpack.c.l.b16 %v178
  %v311 = vunpack.c.l.b16 %v179
  %v312 = vunpack.c.l.b16 %v180
  %v313 = vunpack.c.l.b16 %v181
  %v314 = vunpack.c.l.b16 %v182
  %v315 = vunpack.c.l.b16 %v183
  %v316 = vunpack.c.l.b16 %v184
  %v317 = vunpack.c.l.b16 %v185
  %v318 = vunpack.c.l.b16 %v186
  %v319 = vunpack.c.l.b16 %v187
  %v320 = vunpack.c.l.b16 %v188
  %v321 = vunpack.c.l.b16 %v189
  %v322 = vunpack.c.l.b16 %v190
  %v323 = vunpack.c.l.b16 %v191
  %v324 = vunpack.c.l.b16 %v192
  %v325 = vunpack.c.l.b16 %v193
  %v326 = vunpack.c.l.b16 %v194
  %v327 = vunpack.c.l.b16 %v195
  %v328 = vunpack.c.l.b16 %v196
  %v329 = vunpack.c.l.b16 %v197
  %v330 = vunpack.c.l.b16 %v198
  %v331 = vunpack.c.l.b16 %v199
  %v332 = vunpack.c.l.b16 %v200
  %v333 = vunpack.c.l.b16 %v201
  %v334 = vunpack.c.l.b16 %v202
  %v335 = vunpack.c.l.b16 %v203
  %v336 = vunpack.c.l.b16 %v204
  %v337 = vunpack.c.l.b16 %v205
  %v338 = vunpack.c.l.b16 %v206
  %v339 = vpack.c.b16 %v308, %v307
  %v340 = vpack.c.b16 %v310, %v309
  %v341 = vpack.c.b16 %v312, %v311
  %v342 = vpack.c.b16 %v314, %v313
  %v343 = vpack.c.b16 %v316, %v315
  %v344 = vpack.c.b16 %v318, %v317
  %v345 = vpack.c.b16 %v320, %v319
  %v346 = vpack.c.b16 %v322, %v321
  %v347 = vpack.c.b16 %v324, %v323
  %v348 = vpack.c.b16 %v326, %v325
  %v349 = vpack.c.b16 %v328, %v327
  %v350 = vpack.c.b16 %v330, %v329
  %v351 = vpack.c.b16 %v332, %v331
  %v352 = vpack.c.b16 %v334, %v333
  %v353 = vpack.c.b16 %v336, %v335
  %v354 = vpack.c.b16 %v338, %v337
  %371 = vmatpush.bf16.msra.mxu0 %v346
  %372 = vmatpush.bf16.msra.mxu0 %v345
  %373 = vmatpush.bf16.msra.mxu0 %v344
  %374 = vmatpush.bf16.msra.mxu0 %v343
  %375 = vmatpush.bf16.msra.mxu0 %v342
  %376 = vmatpush.bf16.msra.mxu0 %v341
  %377 = vmatpush.bf16.msra.mxu0 %v340
  %378 = vmatpush.bf16.msra.mxu0 %v339
  %379 = vmatmul.bf16.gmra.mxu0 %v271
  %v380 = vpop.f32.mrf.mxu0
  %v381 = vadd.f32 %v273, %v380
  %v382 = vpop.f32.mrf.mxu0
  %383 = vdwg.mxu0
  %384 = vmatpush.bf16.msra.mxu0 %v354
  %385 = vmatpush.bf16.msra.mxu0 %v353
  %386 = vmatpush.bf16.msra.mxu0 %v352
  %387 = vmatpush.bf16.msra.mxu0 %v351
  %388 = vmatpush.bf16.msra.mxu0 %v350
  %389 = vmatpush.bf16.msra.mxu0 %v349
  %390 = vmatpush.bf16.msra.mxu0 %v348
  %391 = vmatpush.bf16.msra.mxu0 %v347
  %392 = vmatmul.bf16.gmra.mxu0 0
  %v393 = vpop.f32.mrf.mxu0
  %v394 = vadd.f32 %v381, %v393
  %v395 = vpop.f32.mrf.mxu0
  %396 = vdwg.mxu0
  %v397 = vtanh.pop %v394
  %398 = vmatpush.bf16.msra.mxu0 %v247
  %399 = vmatpush.bf16.msra.mxu0 %v246
  %400 = vmatpush.bf16.msra.mxu0 %v245
  %401 = vmatpush.bf16.msra.mxu0 %v244
  %402 = vmatpush.bf16.msra.mxu0 %v243
  %403 = vmatpush.bf16.msra.mxu0 %v242
  %404 = vmatpush.bf16.msra.mxu0 %v241
  %405 = vmatpush.bf16.msra.mxu0 %v240
  %406 = vmatmul.bf16.gmra.mxu0 %v271
  %v407 = vpop.f32.mrf.mxu0
  %v408 = vadd.f32 0.0, %v407
  %v409 = vpop.f32.mrf.mxu0
  %410 = vdwg.mxu0
  %v411 = vadd.f32 %v142, %v408
  %v412 = vtanh.pop %v411
  %v413 = vpack.c.bf16 %v412, %v412
  %v414 = vpack.c.bf16 %v397, %v397
  %415 = vmatpush.bf16.msra.mxu0 %v346
  %416 = vmatpush.bf16.msra.mxu0 %v345
  %417 = vmatpush.bf16.msra.mxu0 %v344
  %418 = vmatpush.bf16.msra.mxu0 %v343
  %419 = vmatpush.bf16.msra.mxu0 %v342
  %420 = vmatpush.bf16.msra.mxu0 %v341
  %421 = vmatpush.bf16.msra.mxu0 %v340
  %422 = vmatpush.bf16.msra.mxu0 %v339
  %423 = vmatmul.bf16.gmra.mxu0 %v413
  %v424 = vpop.f32.mrf.mxu0
  %v425 = vadd.f32 %v273, %v424
  %v426 = vpop.f32.mrf.mxu0
  %427 = vdwg.mxu0
  %428 = vmatpush.bf16.msra.mxu0 %v354
  %429 = vmatpush.bf16.msra.mxu0 %v353
  %430 = vmatpush.bf16.msra.mxu0 %v352
  %431 = vmatpush.bf16.msra.mxu0 %v351
  %432 = vmatpush.bf16.msra.mxu0 %v350
  %433 = vmatpush.bf16.msra.mxu0 %v349
  %434 = vmatpush.bf16.msra.mxu0 %v348
  %435 = vmatpush.bf16.msra.mxu0 %v347
  %436 = vmatmul.bf16.gmra.mxu0 %v414
  %v437 = vpop.f32.mrf.mxu0
  %v438 = vadd.f32 %v425, %v437
  %v439 = vpop.f32.mrf.mxu0
  %440 = vdwg.mxu0
  %v441 = vtanh.pop %v438
  %442 = vmatpush.bf16.msra.mxu0 %v247
  %443 = vmatpush.bf16.msra.mxu0 %v246
  %444 = vmatpush.bf16.msra.mxu0 %v245
  %445 = vmatpush.bf16.msra.mxu0 %v244
  %446 = vmatpush.bf16.msra.mxu0 %v243
  %447 = vmatpush.bf16.msra.mxu0 %v242
  %448 = vmatpush.bf16.msra.mxu0 %v241
  %449 = vmatpush.bf16.msra.mxu0 %v240
  %450 = vmatmul.bf16.gmra.mxu0 %v413
  %v451 = vpop.f32.mrf.mxu0
  %v452 = vadd.f32 0.0, %v451
  %v453 = vpop.f32.mrf.mxu0
  %454 = vdwg.mxu0
  %v455 = vadd.f32 %v145, %v452
  %v456 = vtanh.pop %v455
  %v457 = vpack.c.bf16 %v456, %v456
  %v458 = vpack.c.bf16 %v441, %v441
  %459 = vmatpush.bf16.msra.mxu0 %v346
  %460 = vmatpush.bf16.msra.mxu0 %v345
  %461 = vmatpush.bf16.msra.mxu0 %v344
  %462 = vmatpush.bf16.msra.mxu0 %v343
  %463 = vmatpush.bf16.msra.mxu0 %v342
  %464 = vmatpush.bf16.msra.mxu0 %v341
  %465 = vmatpush.bf16.msra.mxu0 %v340
  %466 = vmatpush.bf16.msra.mxu0 %v339
  %467 = vmatmul.bf16.gmra.mxu0 %v457
  %v468 = vpop.f32.mrf.mxu0
  %v469 = vadd.f32 %v273, %v468
  %v470 = vpop.f32.mrf.mxu0
  %471 = vdwg.mxu0
  %472 = vmatpush.bf16.msra.mxu0 %v354
  %473 = vmatpush.bf16.msra.mxu0 %v353
  %474 = vmatpush.bf16.msra.mxu0 %v352
  %475 = vmatpush.bf16.msra.mxu0 %v351
  %476 = vmatpush.bf16.msra.mxu0 %v350
  %477 = vmatpush.bf16.msra.mxu0 %v349
  %478 = vmatpush.bf16.msra.mxu0 %v348
  %479 = vmatpush.bf16.msra.mxu0 %v347
  %480 = vmatmul.bf16.gmra.mxu0 %v458
  %v481 = vpop.f32.mrf.mxu0
  %v482 = vadd.f32 %v469, %v481
  %v483 = vpop.f32.mrf.mxu0
  %484 = vdwg.mxu0
  %v485 = vtanh.pop %v482
  %486 = vmatpush.bf16.msra.mxu0 %v247
  %487 = vmatpush.bf16.msra.mxu0 %v246
  %488 = vmatpush.bf16.msra.mxu0 %v245
  %489 = vmatpush.bf16.msra.mxu0 %v244
  %490 = vmatpush.bf16.msra.mxu0 %v243
  %491 = vmatpush.bf16.msra.mxu0 %v242
  %492 = vmatpush.bf16.msra.mxu0 %v241
  %493 = vmatpush.bf16.msra.mxu0 %v240
  %494 = vmatmul.bf16.gmra.mxu0 %v457
  %v495 = vpop.f32.mrf.mxu0
  %v496 = vadd.f32 0.0, %v495
  %v497 = vpop.f32.mrf.mxu0
  %498 = vdwg.mxu0
  %v499 = vadd.f32 %v147, %v496
  %v500 = vtanh.pop %v499
  %v501 = vpack.c.bf16 %v500, %v500
  %v502 = vpack.c.bf16 %v485, %v485
  %503 = vmatpush.bf16.msra.mxu0 %v346
  %504 = vmatpush.bf16.msra.mxu0 %v345
  %505 = vmatpush.bf16.msra.mxu0 %v344
  %506 = vmatpush.bf16.msra.mxu0 %v343
  %507 = vmatpush.bf16.msra.mxu0 %v342
  %508 = vmatpush.bf16.msra.mxu0 %v341
  %509 = vmatpush.bf16.msra.mxu0 %v340
  %510 = vmatpush.bf16.msra.mxu0 %v339
  %511 = vmatmul.bf16.gmra.mxu0 %v501
  %v512 = vpop.f32.mrf.mxu0
  %v513 = vadd.f32 %v273, %v512
  %v514 = vpop.f32.mrf.mxu0
  %515 = vdwg.mxu0
  %516 = vmatpush.bf16.msra.mxu0 %v354
  %517 = vmatpush.bf16.msra.mxu0 %v353
  %518 = vmatpush.bf16.msra.mxu0 %v352
  %519 = vmatpush.bf16.msra.mxu0 %v351
  %520 = vmatpush.bf16.msra.mxu0 %v350
  %521 = vmatpush.bf16.msra.mxu0 %v349
  %522 = vmatpush.bf16.msra.mxu0 %v348
  %523 = vmatpush.bf16.msra.mxu0 %v347
  %524 = vmatmul.bf16.gmra.mxu0 %v502
  %v525 = vpop.f32.mrf.mxu0
  %v526 = vadd.f32 %v513, %v525
  %v527 = vpop.f32.mrf.mxu0
  %528 = vdwg.mxu0
  %v529 = vtanh.pop %v526
  %530 = vmatpush.bf16.msra.mxu0 %v247
  %531 = vmatpush.bf16.msra.mxu0 %v246
  %532 = vmatpush.bf16.msra.mxu0 %v245
  %533 = vmatpush.bf16.msra.mxu0 %v244
  %534 = vmatpush.bf16.msra.mxu0 %v243
  %535 = vmatpush.bf16.msra.mxu0 %v242
  %536 = vmatpush.bf16.msra.mxu0 %v241
  %537 = vmatpush.bf16.msra.mxu0 %v240
  %538 = vmatmul.bf16.gmra.mxu0 %v501
  %v539 = vpop.f32.mrf.mxu0
  %v540 = vadd.f32 0.0, %v539
  %v541 = vpop.f32.mrf.mxu0
  %542 = vdwg.mxu0
  %v543 = vadd.f32 %v150, %v540
  %v544 = vtanh.pop %v543
  %v545 = vpack.c.bf16 %v544, %v544
  %v546 = vpack.c.bf16 %v529, %v529
  %547 = vmatpush.bf16.msra.mxu0 %v346
  %548 = vmatpush.bf16.msra.mxu0 %v345
  %549 = vmatpush.bf16.msra.mxu0 %v344
  %550 = vmatpush.bf16.msra.mxu0 %v343
  %551 = vmatpush.bf16.msra.mxu0 %v342
  %552 = vmatpush.bf16.msra.mxu0 %v341
  %553 = vmatpush.bf16.msra.mxu0 %v340
  %554 = vmatpush.bf16.msra.mxu0 %v339
  %555 = vmatmul.bf16.gmra.mxu0 %v545
  %v556 = vpop.f32.mrf.mxu0
  %v557 = vadd.f32 %v273, %v556
  %v558 = vpop.f32.mrf.mxu0
  %559 = vdwg.mxu0
  %560 = vmatpush.bf16.msra.mxu0 %v354
  %561 = vmatpush.bf16.msra.mxu0 %v353
  %562 = vmatpush.bf16.msra.mxu0 %v352
  %563 = vmatpush.bf16.msra.mxu0 %v351
  %564 = vmatpush.bf16.msra.mxu0 %v350
  %565 = vmatpush.bf16.msra.mxu0 %v349
  %566 = vmatpush.bf16.msra.mxu0 %v348
  %567 = vmatpush.bf16.msra.mxu0 %v347
  %568 = vmatmul.bf16.gmra.mxu0 %v546
  %v569 = vpop.f32.mrf.mxu0
  %v570 = vadd.f32 %v557, %v569
  %v571 = vpop.f32.mrf.mxu0
  %572 = vdwg.mxu0
  %v573 = vtanh.pop %v570
  %574 = vmatpush.bf16.msra.mxu0 %v247
  %575 = vmatpush.bf16.msra.mxu0 %v246
  %576 = vmatpush.bf16.msra.mxu0 %v245
  %577 = vmatpush.bf16.msra.mxu0 %v244
  %578 = vmatpush.bf16.msra.mxu0 %v243
  %579 = vmatpush.bf16.msra.mxu0 %v242
  %580 = vmatpush.bf16.msra.mxu0 %v241
  %581 = vmatpush.bf16.msra.mxu0 %v240
  %582 = vmatmul.bf16.gmra.mxu0 %v545
  %v583 = vpop.f32.mrf.mxu0
  %v584 = vadd.f32 0.0, %v583
  %v585 = vpop.f32.mrf.mxu0
  %586 = vdwg.mxu0
  %v587 = vadd.f32 %v152, %v584
  %v588 = vtanh.pop %v587
  %v589 = vpack.c.bf16 %v588, %v588
  %v590 = vpack.c.bf16 %v573, %v573
  %591 = vmatpush.bf16.msra.mxu0 %v346
  %592 = vmatpush.bf16.msra.mxu0 %v345
  %593 = vmatpush.bf16.msra.mxu0 %v344
  %594 = vmatpush.bf16.msra.mxu0 %v343
  %595 = vmatpush.bf16.msra.mxu0 %v342
  %596 = vmatpush.bf16.msra.mxu0 %v341
  %597 = vmatpush.bf16.msra.mxu0 %v340
  %598 = vmatpush.bf16.msra.mxu0 %v339
  %599 = vmatmul.bf16.gmra.mxu0 %v589
  %v600 = vpop.f32.mrf.mxu0
  %v601 = vadd.f32 %v273, %v600
  %v602 = vpop.f32.mrf.mxu0
  %603 = vdwg.mxu0
  %604 = vmatpush.bf16.msra.mxu0 %v354
  %605 = vmatpush.bf16.msra.mxu0 %v353
  %606 = vmatpush.bf16.msra.mxu0 %v352
  %607 = vmatpush.bf16.msra.mxu0 %v351
  %608 = vmatpush.bf16.msra.mxu0 %v350
  %609 = vmatpush.bf16.msra.mxu0 %v349
  %610 = vmatpush.bf16.msra.mxu0 %v348
  %611 = vmatpush.bf16.msra.mxu0 %v347
  %612 = vmatmul.bf16.gmra.mxu0 %v590
  %v613 = vpop.f32.mrf.mxu0
  %v614 = vadd.f32 %v601, %v613
  %v615 = vpop.f32.mrf.mxu0
  %616 = vdwg.mxu0
  %v617 = vtanh.pop %v614
  %618 = vmatpush.bf16.msra.mxu0 %v247
  %619 = vmatpush.bf16.msra.mxu0 %v246
  %620 = vmatpush.bf16.msra.mxu0 %v245
  %621 = vmatpush.bf16.msra.mxu0 %v244
  %622 = vmatpush.bf16.msra.mxu0 %v243
  %623 = vmatpush.bf16.msra.mxu0 %v242
  %624 = vmatpush.bf16.msra.mxu0 %v241
  %625 = vmatpush.bf16.msra.mxu0 %v240
  %626 = vmatmul.bf16.gmra.mxu0 %v589
  %v627 = vpop.f32.mrf.mxu0
  %v628 = vadd.f32 0.0, %v627
  %v629 = vpop.f32.mrf.mxu0
  %630 = vdwg.mxu0
  %v631 = vadd.f32 %v155, %v628
  %v632 = vtanh.pop %v631
  %v633 = vpack.c.bf16 %v632, %v632
  %v634 = vpack.c.bf16 %v617, %v617
  %635 = vmatpush.bf16.msra.mxu0 %v346
  %636 = vmatpush.bf16.msra.mxu0 %v345
  %637 = vmatpush.bf16.msra.mxu0 %v344
  %638 = vmatpush.bf16.msra.mxu0 %v343
  %639 = vmatpush.bf16.msra.mxu0 %v342
  %640 = vmatpush.bf16.msra.mxu0 %v341
  %641 = vmatpush.bf16.msra.mxu0 %v340
  %642 = vmatpush.bf16.msra.mxu0 %v339
  %643 = vmatmul.bf16.gmra.mxu0 %v633
  %v644 = vpop.f32.mrf.mxu0
  %v645 = vadd.f32 %v273, %v644
  %v646 = vpop.f32.mrf.mxu0
  %647 = vdwg.mxu0
  %648 = vmatpush.bf16.msra.mxu0 %v354
  %649 = vmatpush.bf16.msra.mxu0 %v353
  %650 = vmatpush.bf16.msra.mxu0 %v352
  %651 = vmatpush.bf16.msra.mxu0 %v351
  %652 = vmatpush.bf16.msra.mxu0 %v350
  %653 = vmatpush.bf16.msra.mxu0 %v349
  %654 = vmatpush.bf16.msra.mxu0 %v348
  %655 = vmatpush.bf16.msra.mxu0 %v347
  %656 = vmatmul.bf16.gmra.mxu0 %v634
  %v657 = vpop.f32.mrf.mxu0
  %v658 = vadd.f32 %v645, %v657
  %v659 = vpop.f32.mrf.mxu0
  %660 = vdwg.mxu0
  %v661 = vtanh.pop %v658
  %662 = vmatpush.bf16.msra.mxu0 %v247
  %663 = vmatpush.bf16.msra.mxu0 %v246
  %664 = vmatpush.bf16.msra.mxu0 %v245
  %665 = vmatpush.bf16.msra.mxu0 %v244
  %666 = vmatpush.bf16.msra.mxu0 %v243
  %667 = vmatpush.bf16.msra.mxu0 %v242
  %668 = vmatpush.bf16.msra.mxu0 %v241
  %669 = vmatpush.bf16.msra.mxu0 %v240
  %670 = vmatmul.bf16.gmra.mxu0 %v633
  %v671 = vpop.f32.mrf.mxu0
  %v672 = vadd.f32 0.0, %v671
  %v673 = vpop.f32.mrf.mxu0
  %674 = vdwg.mxu0
  %v675 = vadd.f32 %v157, %v672
  %v676 = vtanh.pop %v675
  %v677 = vpack.c.bf16 %v676, %v676
  %v678 = vpack.c.bf16 %v661, %v661
  %679 = vmatpush.bf16.msra.mxu0 %v346
  %680 = vmatpush.bf16.msra.mxu0 %v345
  %681 = vmatpush.bf16.msra.mxu0 %v344
  %682 = vmatpush.bf16.msra.mxu0 %v343
  %683 = vmatpush.bf16.msra.mxu0 %v342
  %684 = vmatpush.bf16.msra.mxu0 %v341
  %685 = vmatpush.bf16.msra.mxu0 %v340
  %686 = vmatpush.bf16.msra.mxu0 %v339
  %687 = vmatmul.bf16.gmra.mxu0 %v677
  %v688 = vpop.f32.mrf.mxu0
  %v689 = vadd.f32 %v273, %v688
  %v690 = vpop.f32.mrf.mxu0
  %691 = vdwg.mxu0
  %692 = vmatpush.bf16.msra.mxu0 %v354
  %693 = vmatpush.bf16.msra.mxu0 %v353
  %694 = vmatpush.bf16.msra.mxu0 %v352
  %695 = vmatpush.bf16.msra.mxu0 %v351
  %696 = vmatpush.bf16.msra.mxu0 %v350
  %697 = vmatpush.bf16.msra.mxu0 %v349
  %698 = vmatpush.bf16.msra.mxu0 %v348
  %699 = vmatpush.bf16.msra.mxu0 %v347
  %700 = vmatmul.bf16.gmra.mxu0 %v678
  %v701 = vpop.f32.mrf.mxu0
  %v702 = vadd.f32 %v689, %v701
  %v703 = vpop.f32.mrf.mxu0
  %704 = vdwg.mxu0
  %v705 = vtanh.pop %v702
  %v706 = vld [vmem:[%s6] sm:$0xff]
  %v707 = vld [vmem:[%s6 + $0x8] sm:$0xff]
  %v708 = vld [vmem:[%s6 + $0x10] sm:$0xff]
  %v709 = vld [vmem:[%s6 + $0x18] sm:$0xff]
  %v710 = vld [vmem:[%s6 + $0x20] sm:$0xff]
  %v711 = vld [vmem:[%s6 + $0x28] sm:$0xff]
  %v712 = vld [vmem:[%s6 + $0x30] sm:$0xff]
  %v713 = vld [vmem:[%s6 + $0x38] sm:$0xff]
  %v714 = vld [vmem:[%s6 + $0x40] sm:$0xff]
  %v715 = vld [vmem:[%s6 + $0x48] sm:$0xff]
  %v716 = vld [vmem:[%s6 + $0x50] sm:$0xff]
  %v717 = vld [vmem:[%s6 + $0x58] sm:$0xff]
  %v718 = vld [vmem:[%s6 + $0x60] sm:$0xff]
  %v719 = vld [vmem:[%s6 + $0x68] sm:$0xff]
  %v720 = vld [vmem:[%s6 + $0x70] sm:$0xff]
  %v721 = vld [vmem:[%s6 + $0x78] sm:$0xff]
  %v722 = vld [vmem:[%s7] sm:$0x1]
  %v724 = vperm.slane %v722, 0
  %726 = vmatpush.msra.mxu0 %v721
  %727 = vmatpush.msra.mxu0 %v720
  %728 = vmatpush.msra.mxu0 %v719
  %729 = vmatpush.msra.mxu0 %v718
  %730 = vmatpush.msra.mxu0 %v717
  %731 = vmatpush.msra.mxu0 %v716
  %732 = vmatpush.msra.mxu0 %v715
  %733 = vmatpush.msra.mxu0 %v714
  %734 = vmatpush.msra.mxu0 %v713
  %735 = vmatpush.msra.mxu0 %v712
  %736 = vmatpush.msra.mxu0 %v711
  %737 = vmatpush.msra.mxu0 %v710
  %738 = vmatpush.msra.mxu0 %v709
  %739 = vmatpush.msra.mxu0 %v708
  %740 = vmatpush.msra.mxu0 %v707
  %741 = vmatpush.msra.mxu0 %v706
  %742 = vmatmul.f32.gmra.mxu0 %v705
  %v743 = vpop.f32.mrf.mxu0
  %v744 = vadd.f32 %v724, %v743
  %745 = vdwg.mxu0
  %vm746 = vcmask 15360
  %747 = vst.msk [vmem:[%s8] sm:$0xff] %vm746, %v744
  // Predicated region
  $region34: #{rnn_forward.1} parent=0 // pred_check
    _
  $region35: #{rnn_forward.1} parent=0 // pred_check_branch
    %749 = sbr.rel (0) target = $region37
  $region36: #{rnn_forward.1} parent=0 // pred_region
    _
  $region37: #{rnn_forward.1} parent=0 // pred_fallthru
    _
  // Predicated region
  $region38: #{rnn_forward.1} parent=0 // pred_check
    _
  $region39: #{rnn_forward.1} parent=0 // pred_check_branch
    %751 = sbr.rel (0) target = $region41
  $region40: #{rnn_forward.1} parent=0 // pred_region
    _
  $region41: #{rnn_forward.1} parent=0 // pred_fallthru
    _

</llo_original>
